<compile_context>
chip_gen: v5e
topology: v5e:2x2
jax: 0.10.0
libtpu: 0.0.40
codegen_flags: <defaults>
</compile_context>

<pallas_src>
import functools

import jax
import jax.numpy as jnp
from jax.experimental import pallas as pl
from jax.experimental.pallas import tpu as pltpu

_LANES = 128
_NUM_SPLITS = 2            # leading "parallel" axis: 2 TCs on v7x, no-op on v5e/v6e
_DEFAULT_BLOCK_ROWS = 1024 # 1024x128 f32 = 512 KiB/block; ~2 MiB double-buffered


def _sublane_multiple(dtype) -> int:
    """Second-to-last block-dim granularity for a packed dtype (f32->8, bf16->16)."""
    return max(8, 32 // jnp.dtype(dtype).itemsize)


def _round_up(x: int, m: int) -> int:
    return ((x + m - 1) // m) * m


def _l1_sum_kernel(p_ref, g_ref, o_ref, *, block_rows, valid_rows,
                   blocks_per_split, needs_mask):
    c = pl.program_id(0)   # parallel split (TensorCore on v7x)
    i = pl.program_id(1)   # reduction axis

    @pl.when(i == 0)
    def _():
        o_ref[...] = jnp.zeros_like(o_ref)

    diff = p_ref[...].astype(jnp.float32) - g_ref[...].astype(jnp.float32)
    absd = jnp.abs(diff)

    if needs_mask:
        # Mask rows beyond the valid range (partial last block and/or the
        # overshoot block introduced by the 2-way parallel split).
        row_start = (c * blocks_per_split + i) * block_rows
        row_ids = row_start + jax.lax.broadcasted_iota(jnp.int32, absd.shape, 0)
        absd = jnp.where(row_ids < valid_rows, absd, 0.0)

    # Fold (block_rows, 128) -> (8, 128) partial sums on the VPU; the final
    # cross-lane/sublane reduce is done once in the wrapper.
    o_ref[...] += absd.reshape(block_rows // 8, 8, _LANES).sum(axis=0)


def _abs_diff_sum(pred, gt, block_rows=_DEFAULT_BLOCK_ROWS):
    """sum(|pred - gt|) over all elements via a tiled Pallas reduction."""
    assert pred.shape == gt.shape, (pred.shape, gt.shape)
    pred = pred.reshape(-1)
    gt = gt.reshape(-1)
    n = pred.shape[0]

    sub = max(_sublane_multiple(pred.dtype), _sublane_multiple(gt.dtype))
    rows = _round_up(pl.cdiv(n, _LANES), sub)
    padded_n = rows * _LANES
    if padded_n != n:
        # Only pad when the flat size is not tile-aligned; padded zeros
        # contribute 0 to |diff|.
        pred = jnp.pad(pred, (0, padded_n - n))
        gt = jnp.pad(gt, (0, padded_n - n))
    pred = pred.reshape(rows, _LANES)
    gt = gt.reshape(rows, _LANES)

    block_rows = min(block_rows, rows)   # rows is a multiple of `sub`, so is this
    total_blocks = pl.cdiv(rows, block_rows)
    blocks_per_split = pl.cdiv(total_blocks, _NUM_SPLITS)
    covered_rows = _NUM_SPLITS * blocks_per_split * block_rows
    needs_mask = covered_rows != rows
    last_block = total_blocks - 1

    def in_index_map(c, i):
        blk = c * blocks_per_split + i
        if needs_mask:
            blk = jnp.minimum(blk, last_block)  # overshoot blocks re-read last block (masked)
        return (blk, 0)

    kernel = functools.partial(
        _l1_sum_kernel,
        block_rows=block_rows,
        valid_rows=rows,
        blocks_per_split=blocks_per_split,
        needs_mask=needs_mask,
    )

    out = pl.pallas_call(
        kernel,
        out_shape=jax.ShapeDtypeStruct((_NUM_SPLITS, 8, _LANES), jnp.float32),
        grid_spec=pltpu.PrefetchScalarGridSpec(
            num_scalar_prefetch=0,
            grid=(_NUM_SPLITS, blocks_per_split),
            in_specs=[
                pl.BlockSpec((block_rows, _LANES), in_index_map),
                pl.BlockSpec((block_rows, _LANES), in_index_map),
            ],
            out_specs=pl.BlockSpec((None, 8, _LANES), lambda c, i: (c, 0, 0)),
        ),
        compiler_params=pltpu.CompilerParams(
            dimension_semantics=("parallel", "arbitrary"),
        ),
    )(pred, gt)
    return jnp.sum(out)


class L1Loss:
    """JAX/Pallas port of the PyTorch L1Loss module (no learnable params)."""

    def __init__(self, key):
        self.key = key

    @functools.partial(jax.jit, static_argnums=0)
    def _compute(self, pred, gt):
        is_complex = jnp.iscomplexobj(pred) or jnp.iscomplexobj(gt)
        if is_complex:
            # Real/imag halves stacked along the row axis -> single kernel call.
            # TODO(synk): PyTorch errors on mixed real/complex dtype promotion;
            # here imag() of a real tensor is treated as zeros (per the helper).
            p = jnp.concatenate(
                [jnp.real(pred).reshape(-1), jnp.imag(pred).reshape(-1)])
            g = jnp.concatenate(
                [jnp.real(gt).reshape(-1), jnp.imag(gt).reshape(-1)])
        else:
            p, g = pred, gt
        total = _abs_diff_sum(p, g)
        return total / jnp.float32(pred.size)

    def forward(self, model_output):
        pred = model_output[self.key]
        gt = model_output[self.key + "_gt"]
        return self._compute(pred, gt)

    __call__ = forward


if __name__ == "__main__":
    key = jax.random.PRNGKey(0)
    k1, k2, k3, k4 = jax.random.split(key, 4)

    # layout: NCHW, as produced by the PyTorch model
    pred = jax.random.normal(k1, (2, 4, 16, 16), dtype=jnp.float32)
    gt = jax.random.normal(k2, (2, 4, 16, 16), dtype=jnp.float32)

    loss_fn = L1Loss("depth")
    loss = jax.block_until_ready(loss_fn({"depth": pred, "depth_gt": gt}))
    ref = jnp.mean(jnp.abs(pred - gt))
    assert jnp.allclose(loss, ref, rtol=1e-5, atol=1e-6), (loss, ref)

    # complex path (real/imag halves handled by one kernel call)
    pc = jax.random.normal(k3, (2, 4, 8, 8)) + 1j * jax.random.normal(k4, (2, 4, 8, 8))
    gc = jax.random.normal(k2, (2, 4, 8, 8)) + 1j * jax.random.normal(k1, (2, 4, 8, 8))
    loss_c = jax.block_until_ready(loss_fn({"depth": pc, "depth_gt": gc}))
    ref_c = jnp.mean(jnp.abs(jnp.real(pc) - jnp.real(gc))
                     + jnp.abs(jnp.imag(pc) - jnp.imag(gc)))
    assert jnp.allclose(loss_c, ref_c, rtol=1e-5, atol=1e-6), (loss_c, ref_c)

    print("KERNEL_OK")
</pallas_src>

<mosaic_0001>
module attributes {stable_mosaic.version = 11 : i64} {
  func.func @_l1_sum_kernel(%arg0: i32, %arg1: i32, %arg2: memref<16x128xf32, #tpu.memory_space<vmem>>, %arg3: memref<16x128xf32, #tpu.memory_space<vmem>>, %arg4: memref<1x8x128xf32, #tpu.memory_space<vmem>>) attributes {dimension_semantics = [#tpu.dimension_semantics<parallel>, #tpu.dimension_semantics<arbitrary>], iteration_bounds = array<i64: 2, 1>, scalar_prefetch = 0 : i64, scratch_operands = 0 : i64, tpu.core_type = #tpu.core_type<tc>, window_params = [{transform_indices = @transform_0, window_bounds = array<i64: 16, 128>}, {transform_indices = @transform_1, window_bounds = array<i64: 16, 128>}, {transform_indices = @transform_2, window_bounds = array<i64: 1, 8, 128>}]} {
    %c0_i32 = arith.constant 0 : i32
    %0 = arith.cmpi eq, %arg1, %c0_i32 : i32
    %1 = arith.extui %0 : i1 to i32
    %c0_i32_0 = arith.constant 0 : i32
    %2 = arith.cmpi ne, %1, %c0_i32_0 : i32
    scf.if %2 {
      %cst_12 = arith.constant 0.000000e+00 : f32
      %25 = vector.broadcast %cst_12 : f32 to vector<8x128xf32>
      %c0_13 = arith.constant 0 : index
      %c0_14 = arith.constant 0 : index
      %c0_15 = arith.constant 0 : index
      %26 = vector.load %arg4[%c0_13, %c0_14, %c0_15] : memref<1x8x128xf32, #tpu.memory_space<vmem>>, vector<1x8x128xf32>
      %27 = vector.shape_cast %26 : vector<1x8x128xf32> to vector<8x128xf32>
      %28 = vector.shape_cast %25 : vector<8x128xf32> to vector<1x8x128xf32>
      tpu.vector_store %arg4[%c0_13, %c0_14, %c0_15], %28 {strides = array<i32>} : memref<1x8x128xf32, #tpu.memory_space<vmem>>, vector<1x8x128xf32>,
    } else {
    }
    %c0 = arith.constant 0 : index
    %c0_1 = arith.constant 0 : index
    %3 = vector.load %arg2[%c0, %c0_1] : memref<16x128xf32, #tpu.memory_space<vmem>>, vector<16x128xf32>
    %c0_2 = arith.constant 0 : index
    %c0_3 = arith.constant 0 : index
    %4 = vector.load %arg3[%c0_2, %c0_3] : memref<16x128xf32, #tpu.memory_space<vmem>>, vector<16x128xf32>
    %5 = arith.subf %3, %4 : vector<16x128xf32>
    %6 = math.absf %5 : vector<16x128xf32>
    %c1_i32 = arith.constant 1 : i32
    %7 = arith.muli %arg0, %c1_i32 : i32
    %8 = arith.addi %7, %arg1 : i32
    %c16_i32 = arith.constant 16 : i32
    %9 = arith.muli %8, %c16_i32 : i32
    %10 = tpu.iota {dimensions = array<i32: 0>} : vector<16x128xi32>
    %11 = vector.broadcast %9 : i32 to vector<16x128xi32>
    %12 = arith.addi %11, %10 : vector<16x128xi32>
    %c16_i32_4 = arith.constant 16 : i32
    %13 = vector.broadcast %c16_i32_4 : i32 to vector<16x128xi32>
    %14 = arith.cmpi slt, %12, %13 : vector<16x128xi32>
    %cst = arith.constant 0.000000e+00 : f32
    %15 = vector.broadcast %cst : f32 to vector<16x128xf32>
    %16 = arith.select %14, %6, %15 : vector<16x128xi1>, vector<16x128xf32>
    %c0_5 = arith.constant 0 : index
    %c0_6 = arith.constant 0 : index
    %c0_7 = arith.constant 0 : index
    %17 = vector.load %arg4[%c0_5, %c0_6, %c0_7] : memref<1x8x128xf32, #tpu.memory_space<vmem>>, vector<1x8x128xf32>
    %18 = vector.shape_cast %17 : vector<1x8x128xf32> to vector<8x128xf32>
    %19 = vector.shape_cast %16 : vector<16x128xf32> to vector<2x8x128xf32>
    %cst_8 = arith.constant dense<0.000000e+00> : vector<8x128xf32>
    %20 = vector.multi_reduction <add>, %19, %cst_8 [0] : vector<2x8x128xf32> to vector<8x128xf32>
    %21 = arith.addf %18, %20 : vector<8x128xf32>
    %c0_9 = arith.constant 0 : index
    %c0_10 = arith.constant 0 : index
    %c0_11 = arith.constant 0 : index
    %22 = vector.load %arg4[%c0_9, %c0_10, %c0_11] : memref<1x8x128xf32, #tpu.memory_space<vmem>>, vector<1x8x128xf32>
    %23 = vector.shape_cast %22 : vector<1x8x128xf32> to vector<8x128xf32>
    %24 = vector.shape_cast %21 : vector<8x128xf32> to vector<1x8x128xf32>
    tpu.vector_store %arg4[%c0_9, %c0_10, %c0_11], %24 {strides = array<i32>} : memref<1x8x128xf32, #tpu.memory_space<vmem>>, vector<1x8x128xf32>,
    return
  }
  func.func @transform_0(%arg0: i32, %arg1: i32) -> (i32, i32) {
    %c1_i32 = arith.constant 1 : i32
    %0 = arith.muli %arg0, %c1_i32 : i32
    %1 = arith.addi %0, %arg1 : i32
    %c0_i32 = arith.constant 0 : i32
    %2 = arith.minsi %1, %c0_i32 : i32
    %c0_i32_0 = arith.constant 0 : i32
    %c0_i32_1 = arith.constant 0 : i32
    return %2, %c0_i32_0 : i32, i32
  }
  func.func @transform_1(%arg0: i32, %arg1: i32) -> (i32, i32) {
    %c1_i32 = arith.constant 1 : i32
    %0 = arith.muli %arg0, %c1_i32 : i32
    %1 = arith.addi %0, %arg1 : i32
    %c0_i32 = arith.constant 0 : i32
    %2 = arith.minsi %1, %c0_i32 : i32
    %c0_i32_0 = arith.constant 0 : i32
    %c0_i32_1 = arith.constant 0 : i32
    return %2, %c0_i32_0 : i32, i32
  }
  func.func @transform_2(%arg0: i32, %arg1: i32) -> (i32, i32, i32) {
    %c0_i32 = arith.constant 0 : i32
    %c0_i32_0 = arith.constant 0 : i32
    %c0_i32_1 = arith.constant 0 : i32
    return %arg0, %c0_i32, %c0_i32_0 : i32, i32, i32
  }
}

</mosaic_0001>

<llo_original>
// kernel: _compute.1
$region0: #{_compute.1}
  #allocation0 [shape = 'u32[]', space=smem, size = 0x4, offset = 0x4, fixed_abs, tag = 'smem constant byte address 0x4 - core index']
  #allocation1 [shape = 'u32[72,128]{1,0:T(1,128)}', space=vmem, size = 0x9000, scoped, tag = 'internal scratch']
  %s0 = inlined_call_operand.vmem [shape: f32[16,128], index: 0, kind: input, shape index: {}]
  %s1 = inlined_call_operand.vmem [shape: f32[16,128], index: 1, kind: input, shape index: {}]
  %s2 = inlined_call_operand.vmem [shape: f32[2,8,128], index: 2, kind: output, shape index: {}]
  %s3 = sld [smem:[#allocation0]]
  $region45: #{_compute.1} parent=0
    _
  %s5 = ssub.s32 1, %s3
  %s6 = scalar_select 0, %s5, %s3
  loop: start=0, step=1, limit=4
  $region2: #{_compute.1} parent=0 // loop_pre_header
    _
  $region3: #{_compute.1} parent=0 // loop_header
    %s8 = sphi 0, %s12
    %p9 = scmp.ge.s32.totalorder %s8, 4
    %s15 = sphi 0, %s27
    %s16 = sphi 0, %s23
    %s17 = sphi 0, %s15
    %s18 = sphi 0, %s16
    %s19 = sphi 0, %s17
    %s20 = sphi 0, %s18
    %s36 = sphi 0, %s38
    %s39 = sphi 0, %s36
    %s40 = sphi 0, %s39
    %s56 = sphi 0, %s40
    %s68 = sphi 0, %s70
    %s71 = sphi 0, %s68
    %s72 = sphi 0, %s71
    %s88 = sphi 0, %s72
    %s94 = sphi 0, %s96
    %s97 = sphi 0, %s94
    %s98 = sphi 0, %s97
    %s114 = sphi 0, %s98
  $region4: #{_compute.1} parent=0 // loop_header_branch
    %11 = sbr.rel (%p9) target = $region8
  $region5: #{_compute.1} parent=0 // loop_body
    %s13 = ssub.s32 %s8, 1
    %s14 = ssub.s32 %s8, 2
    %s21 = sadd.s32 1, %s16
    %p22 = scmp.ge.s32.totalorder %s21, 1
    %s23 = scalar_select %p22, 0, %s21
    %s24 = sadd.s32 1, %s15
    %s25 = scalar_select %p22, %s24, %s15
    %p26 = scmp.ge.s32.totalorder %s25, 2
    %s27 = scalar_select %p26, 0, %s25
    %s28 = sadd.s32 %s15, %s16
    %p29 = scmp.lt.s32.totalorder %s28, 0
    %s30 = scalar_select %p29, %s28, 0
    %s31 = sadd.s32 %s27, %s23
    %p32 = scmp.lt.s32.totalorder %s31, 0
    %s33 = scalar_select %p32, %s31, 0
    %s34 = ssub.s32 %s30, %s33
    %p35 = scmp.eq.s32.totalorder %s34, 0
    %s37 = sadd.s32 %s36, 1
    %s38 = scalar_select %p35, %s36, %s37
    %p41 = pneg %p35
    %p42 = scmp.eq.s32.totalorder %s8, 1
    %p43 = por %p41, %p42
    %p44 = scmp.ne.s32.totalorder %s36, %s39
    %p45 = scmp.eq.s32.totalorder %s8, 0
    %p46 = por %p44, %p45
    %p47 = scmp.ne.s32.totalorder %s36, %s39
    %p48 = scmp.eq.s32.totalorder %s13, 1
    %p49 = por %p47, %p48
    %p50 = scmp.ne.s32.totalorder %s39, %s40
    %p51 = scmp.eq.s32.totalorder %s13, 0
    %p52 = por %p50, %p51
    %p53 = scmp.ne.s32.totalorder %s39, %s40
    %p54 = scmp.eq.s32.totalorder %s14, 1
    %p55 = por %p53, %p54
    %p57 = scmp.ne.s32.totalorder %s40, %s56
    %p58 = scmp.eq.s32.totalorder %s14, 0
    %p59 = por %p57, %p58
    %s60 = sadd.s32 %s15, %s16
    %p61 = scmp.lt.s32.totalorder %s60, 0
    %s62 = scalar_select %p61, %s60, 0
    %s63 = sadd.s32 %s27, %s23
    %p64 = scmp.lt.s32.totalorder %s63, 0
    %s65 = scalar_select %p64, %s63, 0
    %s66 = ssub.s32 %s62, %s65
    %p67 = scmp.eq.s32.totalorder %s66, 0
    %s69 = sadd.s32 %s68, 1
    %s70 = scalar_select %p67, %s68, %s69
    %p73 = pneg %p67
    %p74 = scmp.eq.s32.totalorder %s8, 1
    %p75 = por %p73, %p74
    %p76 = scmp.ne.s32.totalorder %s68, %s71
    %p77 = scmp.eq.s32.totalorder %s8, 0
    %p78 = por %p76, %p77
    %p79 = scmp.ne.s32.totalorder %s68, %s71
    %p80 = scmp.eq.s32.totalorder %s13, 1
    %p81 = por %p79, %p80
    %p82 = scmp.ne.s32.totalorder %s71, %s72
    %p83 = scmp.eq.s32.totalorder %s13, 0
    %p84 = por %p82, %p83
    %p85 = scmp.ne.s32.totalorder %s71, %s72
    %p86 = scmp.eq.s32.totalorder %s14, 1
    %p87 = por %p85, %p86
    %p89 = scmp.ne.s32.totalorder %s72, %s88
    %p90 = scmp.eq.s32.totalorder %s14, 0
    %p91 = por %p89, %p90
    %s92 = ssub.s32 %s15, %s27
    %p93 = scmp.eq.s32.totalorder %s92, 0
    %s95 = sadd.s32 %s94, 1
    %s96 = scalar_select %p93, %s94, %s95
    %p99 = pneg %p93
    %p100 = scmp.eq.s32.totalorder %s8, 1
    %p101 = por %p99, %p100
    %p102 = scmp.ne.s32.totalorder %s94, %s97
    %p103 = scmp.eq.s32.totalorder %s8, 0
    %p104 = por %p102, %p103
    %p105 = scmp.ne.s32.totalorder %s94, %s97
    %p106 = scmp.eq.s32.totalorder %s13, 1
    %p107 = por %p105, %p106
    %p108 = scmp.ne.s32.totalorder %s97, %s98
    %p109 = scmp.eq.s32.totalorder %s13, 0
    %p110 = por %p108, %p109
    %p111 = scmp.ne.s32.totalorder %s97, %s98
    %p112 = scmp.eq.s32.totalorder %s14, 1
    %p113 = por %p111, %p112
    %p115 = scmp.ne.s32.totalorder %s98, %s114
    %p116 = scmp.eq.s32.totalorder %s14, 0
    %p117 = por %p115, %p116
    %p118 = scmp.le.s32.totalorder 1, %s8
    %p119 = scmp.lt.s32.totalorder %s8, 3
    %p120 = pnand %p118, %p119
    %p121 = pneg %p120
    // Predicated region
    $region9: #{_compute.1} parent=5 // pred_check
      _
    $region10: #{_compute.1} parent=5 // pred_check_branch
      %123 = sbr.rel (%p120) target = $region12
    $region11: #{_compute.1} parent=5 // pred_region
      %s124 = ssub.s32 %s8, 1
    $region12: #{_compute.1} parent=5 // pred_fallthru
      _
    %p125 = scmp.lt.s32.totalorder %s8, 2
    // Predicated region
    $region13: #{_compute.1} parent=5 // pred_check
      %p126 = pneg %p125
    $region14: #{_compute.1} parent=5 // pred_check_branch
      %128 = sbr.rel (%p126) target = $region16
    $region15: #{_compute.1} parent=5 // pred_region
      // Predicated region
      $region17: #{_compute.1} parent=15 // pred_check
        %p129 = pneg %p46
      $region18: #{_compute.1} parent=15 // pred_check_branch
        %131 = sbr.rel (%p129) target = $region20
      $region19: #{_compute.1} parent=15 // pred_region
        %s132 = sadd.s32 %s15, %s16
        %p133 = scmp.lt.s32.totalorder %s132, 0
        %s134 = scalar_select %p133, %s132, 0
        %s135 = smul.u32 2, %s134
        %p136 = scmp.lt.s32.totalorder %s135, 1
        %s137 = scalar_select %p136, %s135, 1
        %s138 = smul.addr %s137, 8
        %s139 = scalar_lea.vmem %s0, %s138
        %s140 = sadd.s32 %s15, %s16
        %p141 = scmp.lt.s32.totalorder %s140, 0
        %s142 = scalar_select %p141, %s140, 0
        %s143 = smul.u32 2, %s142
      $region20: #{_compute.1} parent=15 // pred_fallthru
        _
      // Predicated region
      $region21: #{_compute.1} parent=15 // pred_check
        %p144 = pneg %p78
      $region22: #{_compute.1} parent=15 // pred_check_branch
        %146 = sbr.rel (%p144) target = $region24
      $region23: #{_compute.1} parent=15 // pred_region
        %s147 = sadd.s32 %s15, %s16
        %p148 = scmp.lt.s32.totalorder %s147, 0
        %s149 = scalar_select %p148, %s147, 0
        %s150 = smul.u32 2, %s149
        %p151 = scmp.lt.s32.totalorder %s150, 1
        %s152 = scalar_select %p151, %s150, 1
        %s153 = smul.addr %s152, 8
        %s154 = scalar_lea.vmem %s1, %s153
        %s155 = sadd.s32 %s15, %s16
        %p156 = scmp.lt.s32.totalorder %s155, 0
        %s157 = scalar_select %p156, %s155, 0
        %s158 = smul.u32 2, %s157
      $region24: #{_compute.1} parent=15 // pred_fallthru
        _
    $region16: #{_compute.1} parent=5 // pred_fallthru
      _
    %p159 = scmp.le.s32.totalorder 1, %s8
    %p160 = scmp.lt.s32.totalorder %s8, 3
    %p161 = pnand %p159, %p160
    %p162 = pneg %p161
    // Predicated region
    $region25: #{_compute.1} parent=5 // pred_check
      _
    $region26: #{_compute.1} parent=5 // pred_check_branch
      %164 = sbr.rel (%p161) target = $region28
    $region27: #{_compute.1} parent=5 // pred_region
      %s165 = ssub.s32 %s8, 1
      %s166 = sadd.s32 %s17, %s18
      %p167 = scmp.lt.s32.totalorder %s166, 0
      %s168 = scalar_select %p167, %s166, 0
      %s169 = smul.u32 2, %s168
      %p170 = scmp.lt.s32.totalorder %s169, 1
      %s171 = scalar_select %p170, %s169, 1
      %s172 = smul.addr %s171, 8
      %s173 = scalar_lea.vmem %s0, %s172
      %p174 = pneg %p52
      %p175 = pneg %p49
      %s176 = sadd.s32 %s17, %s18
      %p177 = scmp.lt.s32.totalorder %s176, 0
      %s178 = scalar_select %p177, %s176, 0
      %s179 = smul.u32 2, %s178
      %p180 = scmp.lt.s32.totalorder %s179, 1
      %s181 = scalar_select %p180, %s179, 1
      %s182 = smul.addr %s181, 8
      %s183 = scalar_lea.vmem %s1, %s182
      %p184 = pneg %p84
      %p185 = pneg %p81
      %p186 = pneg %p110
      %p187 = pneg %p107
      %p188 = scmp.lt.s32.totalorder %s17, 1
      %s189 = scalar_select %p188, %s17, 1
      %s190 = smul.addr %s189, 8
      %s191 = scalar_lea.vmem %s2, %s190
      %s192 = sadd.s32 %s17, %s18
      %p193 = scmp.lt.s32.totalorder %s192, 0
      %s194 = scalar_select %p193, %s192, 0
      %s195 = smul.u32 2, %s194
      %p196 = scmp.lt.s32.totalorder %s195, 1
      %s197 = scalar_select %p196, %s195, 1
      %s198 = smul.addr %s197, 8
      %s199 = scalar_lea.vmem %s0, %s198
      %s200 = sadd.s32 %s17, %s18
      %p201 = scmp.lt.s32.totalorder %s200, 0
      %s202 = scalar_select %p201, %s200, 0
      %s203 = smul.u32 2, %s202
      %s204 = sadd.s32 %s17, %s18
      %p205 = scmp.lt.s32.totalorder %s204, 0
      %s206 = scalar_select %p205, %s204, 0
      %s207 = smul.u32 2, %s206
      %p208 = scmp.lt.s32.totalorder %s207, 1
      %s209 = scalar_select %p208, %s207, 1
      %s210 = smul.addr %s209, 8
      %s211 = scalar_lea.vmem %s1, %s210
      %s212 = sadd.s32 %s17, %s18
      %p213 = scmp.lt.s32.totalorder %s212, 0
      %s214 = scalar_select %p213, %s212, 0
      %s215 = smul.u32 2, %s214
      %p216 = scmp.lt.s32.totalorder %s17, 1
      %s217 = scalar_select %p216, %s17, 1
      %s218 = smul.addr %s217, 8
      %s219 = scalar_lea.vmem %s2, %s218
      %p220 = scmp.eq.s32.totalorder %s18, 0
      // Predicated region
      $region29: #{_compute.1} parent=27 // pred_check
        %p221 = pneg %p220
      $region30: #{_compute.1} parent=27 // pred_check_branch
        %223 = sbr.rel (%p221) target = $region32
      $region31: #{_compute.1} parent=27 // pred_region
        %224 = vst [vmem:[%s219] sm:$0xff] 0.0
      $region32: #{_compute.1} parent=27 // pred_fallthru
        _
      %v225 = vld [vmem:[%s199] sm:$0xff]
      %v226 = vld [vmem:[%s199 + $0x8] sm:$0xff]
      %v227 = vld [vmem:[%s211] sm:$0xff]
      %v228 = vld [vmem:[%s211 + $0x8] sm:$0xff]
      %v229 = vsub.f32 %v225, %v227
      %v230 = vsub.f32 %v226, %v228
      %v231 = vand.u32 2147483647, %v229
      %v232 = vand.u32 2147483647, %v230
      %s233 = sadd.s32 %s17, %s18
      %s234 = smul.u32 %s233, 16
      %v235 = vlaneseq
      %v236 = vshrl.u32 %v235, 7
      %v237 = vadd.s32 %v236, 8
      %v238 = vstv %s234
      %v239 = vadd.s32 %v238, %v236
      %v240 = vadd.s32 %v238, %v237
      %vm241 = vcmp.lt.s32.totalorder %v239, 16
      %vm242 = vcmp.lt.s32.totalorder %v240, 16
      %v243 = vsel %vm241, %v231, 0.0
      %v244 = vsel %vm242, %v232, 0.0
      %v245 = vld [vmem:[%s219] sm:$0xff]
      %v246 = vadd.f32 %v243, %v244
      %v247 = vadd.f32 %v245, %v246
      %248 = vst [vmem:[%s219] sm:$0xff] %v247
      %p249 = scmp.lt.s32.totalorder %s17, 1
      %s250 = scalar_select %p249, %s17, 1
      %s251 = smul.addr %s250, 8
      %s252 = scalar_lea.vmem %s2, %s251
      // Predicated region
      $region33: #{_compute.1} parent=27 // pred_check
        %p253 = pneg %p107
      $region34: #{_compute.1} parent=27 // pred_check_branch
        %255 = sbr.rel (%p253) target = $region36
      $region35: #{_compute.1} parent=27 // pred_region
        _
      $region36: #{_compute.1} parent=27 // pred_fallthru
        _
    $region28: #{_compute.1} parent=5 // pred_fallthru
      _
    %p256 = scmp.le.s32.totalorder 2, %s8
    // Predicated region
    $region37: #{_compute.1} parent=5 // pred_check
      %p257 = pneg %p256
    $region38: #{_compute.1} parent=5 // pred_check_branch
      %259 = sbr.rel (%p257) target = $region40
    $region39: #{_compute.1} parent=5 // pred_region
      %s260 = ssub.s32 %s8, 2
      // Predicated region
      $region41: #{_compute.1} parent=39 // pred_check
        %p261 = pneg %p113
      $region42: #{_compute.1} parent=39 // pred_check_branch
        %263 = sbr.rel (%p261) target = $region44
      $region43: #{_compute.1} parent=39 // pred_region
        %p264 = scmp.lt.s32.totalorder %s19, 1
        %s265 = scalar_select %p264, %s19, 1
        %s266 = smul.addr %s265, 8
        %s267 = scalar_lea.vmem %s2, %s266
      $region44: #{_compute.1} parent=39 // pred_fallthru
        _
    $region40: #{_compute.1} parent=5 // pred_fallthru
      _
  $region6: #{_compute.1} parent=0 // loop_footer
    %s12 = sadd.s32 1, %s8
  $region7: #{_compute.1} parent=0 // loop_footer_branch
    %7 = sbr.rel target = $region3
  $region8: #{_compute.1} parent=0 // loop_exit
    _

</llo_original>
